<compile_context>
chip_gen: v5e
topology: v5e:2x2
jax: 0.10.0
libtpu: 0.0.40
codegen_flags: <defaults>
</compile_context>

<pallas_src>
import functools

import jax
import jax.numpy as jnp
from jax.experimental import pallas as pl
from jax.experimental.pallas import tpu as pltpu

_X_TILE_BYTES = 4 * 1024 * 1024        # per-x-block VMEM budget (double-buffered -> ~8 MiB)
_VMEM_LIMIT_BYTES = 48 * 1024 * 1024   # explicit ceiling; leaves headroom on v7x (64 MiB)


def _simple_head_kernel(x_ref, w_ref, b_ref, o_ref, acc_ref, *, inv_hw, spatial_axis):
    """Grid = (batch_tiles [parallel], spatial_chunks [arbitrary / reduction])."""
    k = pl.program_id(1)

    @pl.when(k == 0)
    def _():
        acc_ref[...] = jnp.zeros_like(acc_ref)

    # Partial spatial sum for this chunk, accumulated in f32 (no full-tile up-cast).
    acc_ref[...] += jnp.sum(x_ref[...], axis=spatial_axis, dtype=jnp.float32)

    @pl.when(k == pl.num_programs(1) - 1)
    def _():
        pooled = acc_ref[...] * inv_hw                            # (TILE_N, C) f32  == AvgPool+flatten
        logits = jnp.dot(pooled, w_ref[...].astype(jnp.float32),
                         preferred_element_type=jnp.float32)      # (TILE_N, K)
        logits = logits + b_ref[...].astype(jnp.float32)          # broadcast (1, K)
        o_ref[...] = logits.astype(o_ref.dtype)


def _largest_aligned_divisor(total, max_tile, align):
    """Largest d dividing `total`, d <= max_tile, with d % align == 0 (or d == total)."""
    max_tile = max(1, min(total, max_tile))
    for d in range(max_tile, 0, -1):
        if total % d == 0 and (d % align == 0 or d == total):
            return d
    return total


def simple_head_forward(x_nchw, weight, bias, *, tile_n=None, tile_s=None):
    """x_nchw: (N, C, H, W); weight: (num_classes, C) [PyTorch convention];
    bias: (num_classes,). Returns logits (N, num_classes)."""
    N, C, H, W = x_nchw.shape
    HW = H * W
    K = weight.shape[0]
    itemsize = x_nchw.dtype.itemsize

    # ---- layout selection: keep the streamed operand lane-dense ----------------------
    if HW % 128 == 0 or C % 128 != 0:
        # (N, C, HW): HW on lanes, reduce over last axis. Zero-copy reshape.
        x3 = x_nchw.reshape(N, C, HW)
        spatial_axis = 2
        s_align = 128
        make_x_block = lambda tn, ts: (tn, C, ts)
        x_index_map = lambda i, k: (i, 0, k)
    else:
        # (N, HW, C): C (multiple of 128) on lanes, reduce over sublane axis.
        x3 = jnp.transpose(x_nchw.reshape(N, C, HW), (0, 2, 1))
        spatial_axis = 1
        s_align = 8
        make_x_block = lambda tn, ts: (tn, ts, C)
        x_index_map = lambda i, k: (i, k, 0)

    # ---- tile sizing against the VMEM budget ------------------------------------------
    if tile_s is None:
        per_sample = C * HW * itemsize
        if per_sample <= _X_TILE_BYTES:
            tile_s = HW
        else:
            max_s = max(1, _X_TILE_BYTES // (C * itemsize))
            tile_s = _largest_aligned_divisor(HW, max_s, s_align)
    if tile_n is None:
        per_sample_tile = C * tile_s * itemsize
        max_n = max(1, _X_TILE_BYTES // per_sample_tile)
        tile_n = _largest_aligned_divisor(N, max_n, 8)

    assert HW % tile_s == 0 and (tile_s % s_align == 0 or tile_s == HW), "bad spatial tile"
    assert N % tile_n == 0 and (tile_n % 8 == 0 or tile_n == N), "bad batch tile"

    grid = (N // tile_n, HW // tile_s)

    w_t = weight.T                       # (C, K) so (pooled @ w_t) is lane-dense on K
    b2 = bias.reshape(1, K)
    # TODO(synk): if K is ever large & hot and not a multiple of 128, pad K to 128 here
    # and slice the output in the wrapper for unmasked vector stores.

    kernel = functools.partial(_simple_head_kernel,
                               inv_hw=float(1.0 / HW),
                               spatial_axis=spatial_axis)

    out = pl.pallas_call(
        kernel,
        out_shape=jax.ShapeDtypeStruct((N, K), x_nchw.dtype),
        grid=grid,
        in_specs=[
            pl.BlockSpec(make_x_block(tile_n, tile_s), x_index_map),
            pl.BlockSpec((C, K), lambda i, k: (0, 0)),   # weight stays resident
            pl.BlockSpec((1, K), lambda i, k: (0, 0)),   # bias stays resident
        ],
        out_specs=pl.BlockSpec((tile_n, K), lambda i, k: (i, 0)),
        scratch_shapes=[pltpu.VMEM((tile_n, C), jnp.float32)],
        compiler_params=pltpu.CompilerParams(
            dimension_semantics=("parallel", "arbitrary"),
            vmem_limit_bytes=_VMEM_LIMIT_BYTES),
    )(x3, w_t, b2)
    return out


if __name__ == "__main__":
    key = jax.random.PRNGKey(0)
    k1, k2, k3 = jax.random.split(key, 3)

    # Case 1: H*W lane-dense layout (H*W % 128 == 0). Tiles forced small so both the
    # "parallel" batch axis and the "arbitrary" spatial reduction axis are exercised.
    N, C, H, W, K = 16, 128, 16, 16, 10
    x = jax.random.normal(k1, (N, C, H, W), dtype=jnp.float32)
    # SimpleHead.weights_init: weight ~ Normal(0, 0.001), bias = 0.
    weight = 0.001 * jax.random.normal(k2, (K, C), dtype=jnp.float32)
    bias = jnp.zeros((K,), dtype=jnp.float32)

    out = simple_head_forward(x, weight, bias, tile_n=8, tile_s=128)
    out = jax.block_until_ready(out)
    ref = jnp.mean(x, axis=(2, 3)) @ weight.T + bias
    assert out.shape == (N, K)
    assert jnp.allclose(out, ref, atol=1e-5, rtol=1e-5), "case 1 mismatch vs reference"

    # Case 2: realistic 7x7 head spatial (H*W=49 not a multiple of 128) -> channels-last
    # lane-dense path, automatic tile selection.
    N2, C2, H2, W2 = 4, 256, 7, 7
    x2 = jax.random.normal(k3, (N2, C2, H2, W2), dtype=jnp.float32)
    weight2 = 0.001 * jax.random.normal(k2, (K, C2), dtype=jnp.float32)
    bias2 = jnp.zeros((K,), dtype=jnp.float32)

    out2 = jax.block_until_ready(simple_head_forward(x2, weight2, bias2))
    ref2 = jnp.mean(x2, axis=(2, 3)) @ weight2.T + bias2
    assert out2.shape == (N2, K)
    assert jnp.allclose(out2, ref2, atol=1e-5, rtol=1e-5), "case 2 mismatch vs reference"

    print("KERNEL_OK")
</pallas_src>

<mosaic_0001>
module attributes {stable_mosaic.version = 11 : i64} {
  func.func @_simple_head_kernel(%arg0: i32, %arg1: i32, %arg2: memref<8x128x128xf32, #tpu.memory_space<vmem>>, %arg3: memref<128x10xf32, #tpu.memory_space<vmem>>, %arg4: memref<1x10xf32, #tpu.memory_space<vmem>>, %arg5: memref<8x10xf32, #tpu.memory_space<vmem>>, %arg6: memref<8x128xf32, #tpu.memory_space<vmem>>) attributes {dimension_semantics = [#tpu.dimension_semantics<parallel>, #tpu.dimension_semantics<arbitrary>], iteration_bounds = array<i64: 2, 2>, scalar_prefetch = 0 : i64, scratch_operands = 1 : i64, tpu.core_type = #tpu.core_type<tc>, window_params = [{transform_indices = @transform_0, window_bounds = array<i64: 8, 128, 128>}, {pipeline_mode = #tpu.pipeline_mode<synchronous>, transform_indices = @transform_1, window_bounds = array<i64: 128, 10>}, {pipeline_mode = #tpu.pipeline_mode<synchronous>, transform_indices = @transform_2, window_bounds = array<i64: 1, 10>}, {transform_indices = @transform_3, window_bounds = array<i64: 8, 10>}]} {
    %c0_i32 = arith.constant 0 : i32
    %0 = arith.cmpi eq, %arg1, %c0_i32 : i32
    %1 = arith.extui %0 : i1 to i32
    %c0_i32_0 = arith.constant 0 : i32
    %2 = arith.cmpi ne, %1, %c0_i32_0 : i32
    scf.if %2 {
      %cst_8 = arith.constant 0.000000e+00 : f32
      %11 = vector.broadcast %cst_8 : f32 to vector<8x128xf32>
      %c0_9 = arith.constant 0 : index
      %c0_10 = arith.constant 0 : index
      %12 = vector.load %arg6[%c0_9, %c0_10] : memref<8x128xf32, #tpu.memory_space<vmem>>, vector<8x128xf32>
      tpu.vector_store %arg6[%c0_9, %c0_10], %11 {strides = array<i32>} : memref<8x128xf32, #tpu.memory_space<vmem>>, vector<8x128xf32>,
    } else {
    }
    %c0 = arith.constant 0 : index
    %c0_1 = arith.constant 0 : index
    %3 = vector.load %arg6[%c0, %c0_1] : memref<8x128xf32, #tpu.memory_space<vmem>>, vector<8x128xf32>
    %c0_2 = arith.constant 0 : index
    %c0_3 = arith.constant 0 : index
    %c0_4 = arith.constant 0 : index
    %4 = vector.load %arg2[%c0_2, %c0_3, %c0_4] : memref<8x128x128xf32, #tpu.memory_space<vmem>>, vector<8x128x128xf32>
    %cst = arith.constant dense<0.000000e+00> : vector<8x128xf32>
    %5 = vector.multi_reduction <add>, %4, %cst [2] : vector<8x128x128xf32> to vector<8x128xf32>
    %6 = arith.addf %3, %5 : vector<8x128xf32>
    %c0_5 = arith.constant 0 : index
    %c0_6 = arith.constant 0 : index
    %7 = vector.load %arg6[%c0_5, %c0_6] : memref<8x128xf32, #tpu.memory_space<vmem>>, vector<8x128xf32>
    tpu.vector_store %arg6[%c0_5, %c0_6], %6 {strides = array<i32>} : memref<8x128xf32, #tpu.memory_space<vmem>>, vector<8x128xf32>,
    %c1_i32 = arith.constant 1 : i32
    %8 = arith.cmpi eq, %arg1, %c1_i32 : i32
    %9 = arith.extui %8 : i1 to i32
    %c0_i32_7 = arith.constant 0 : i32
    %10 = arith.cmpi ne, %9, %c0_i32_7 : i32
    scf.if %10 {
      %c0_8 = arith.constant 0 : index
      %c0_9 = arith.constant 0 : index
      %11 = vector.load %arg6[%c0_8, %c0_9] : memref<8x128xf32, #tpu.memory_space<vmem>>, vector<8x128xf32>
      %cst_10 = arith.constant 3.906250e-03 : f32
      %12 = vector.broadcast %cst_10 : f32 to vector<8x128xf32>
      %13 = arith.mulf %11, %12 : vector<8x128xf32>
      %c0_11 = arith.constant 0 : index
      %c0_12 = arith.constant 0 : index
      %14 = vector.load %arg3[%c0_11, %c0_12] : memref<128x10xf32, #tpu.memory_space<vmem>>, vector<128x10xf32>
      %cst_13 = arith.constant dense<0.000000e+00> : vector<8x10xf32>
      %15 = tpu.matmul %13, %14, %cst_13 {dimension_numbers = #tpu.dot_dimension_numbers<[1], [0], [0], [1], [0, 0, 1, 1], [], []>} : vector<8x128xf32>, vector<128x10xf32>, vector<8x10xf32> -> vector<8x10xf32>
      %c0_14 = arith.constant 0 : index
      %c0_15 = arith.constant 0 : index
      %16 = vector.load %arg4[%c0_14, %c0_15] : memref<1x10xf32, #tpu.memory_space<vmem>>, vector<1x10xf32>
      %17 = vector.broadcast %16 : vector<1x10xf32> to vector<8x10xf32>
      %18 = arith.addf %15, %17 : vector<8x10xf32>
      %c0_16 = arith.constant 0 : index
      %c0_17 = arith.constant 0 : index
      %19 = vector.load %arg5[%c0_16, %c0_17] : memref<8x10xf32, #tpu.memory_space<vmem>>, vector<8x10xf32>
      tpu.vector_store %arg5[%c0_16, %c0_17], %18 {strides = array<i32>} : memref<8x10xf32, #tpu.memory_space<vmem>>, vector<8x10xf32>,
    } else {
    }
    return
  }
  func.func @transform_0(%arg0: i32, %arg1: i32) -> (i32, i32, i32) {
    %c0_i32 = arith.constant 0 : i32
    %c0_i32_0 = arith.constant 0 : i32
    return %arg0, %c0_i32, %arg1 : i32, i32, i32
  }
  func.func @transform_1(%arg0: i32, %arg1: i32) -> (i32, i32) {
    %c0_i32 = arith.constant 0 : i32
    %c0_i32_0 = arith.constant 0 : i32
    %c0_i32_1 = arith.constant 0 : i32
    return %c0_i32, %c0_i32_0 : i32, i32
  }
  func.func @transform_2(%arg0: i32, %arg1: i32) -> (i32, i32) {
    %c0_i32 = arith.constant 0 : i32
    %c0_i32_0 = arith.constant 0 : i32
    %c0_i32_1 = arith.constant 0 : i32
    return %c0_i32, %c0_i32_0 : i32, i32
  }
  func.func @transform_3(%arg0: i32, %arg1: i32) -> (i32, i32) {
    %c0_i32 = arith.constant 0 : i32
    %c0_i32_0 = arith.constant 0 : i32
    return %arg0, %c0_i32 : i32, i32
  }
}

</mosaic_0001>

<llo_original>
// kernel: tpu_custom_call.1
$region0: #{tpu_custom_call.1}
  #allocation0 [shape = 'u32[]', space=smem, size = 0x4, offset = 0x4, fixed_abs, tag = 'smem constant byte address 0x4 - core index']
  #allocation1 [shape = 'u32[72,128]{1,0:T(1,128)}', space=vmem, size = 0x9000, scoped, tag = 'internal scratch']
  #allocation2 [shape = 'f32[8,128]{1,0:T(8,128)}', space=vmem, size = 0x1000, scoped, tag = 'scratch operand']
  %s0 = inlined_call_operand.hbm [shape: f32[16,128,256], index: 0, kind: input, shape index: {}]
  %s1 = inlined_call_operand.vmem [shape: f32[128,10], index: 1, kind: input, shape index: {}]
  %s2 = inlined_call_operand.hbm [shape: f32[1,10], index: 2, kind: input, shape index: {}]
  %s3 = inlined_call_operand.hbm [shape: f32[16,10], index: 3, kind: output, shape index: {}]
  %s4 = sld [smem:[#allocation0]]
  $region61: #{tpu_custom_call.1} parent=0
    _
  %s6 = ssub.s32 1, %s4
  %s7 = scalar_select 0, %s6, %s4
  $region1: #{tpu_custom_call.1} parent=0
    #allocation3 [shape = 'u8[1048576]{0}', space=vmem, size = 0x100000, scoped, tag = 'input window, operand 0']
    #allocation4 [shape = 's32[2]{0}', space=sflag, size = 0x8, scoped, tag = 'scoped memory for tpu_custom_call.1']
    #allocation5 [shape = 's32[2]{0}', space=sflag, size = 0x8, scoped, tag = 'scoped memory for tpu_custom_call.1']
    #allocation6 [shape = 'u8[512]{0}', space=vmem, size = 0x400, scoped, tag = 'input window, operand 2, single buffered']
    #allocation7 [shape = 's32[1]{0}', space=sflag, size = 0x4, scoped, tag = 'scoped memory for tpu_custom_call.1']
    #allocation8 [shape = 'u8[8192]{0}', space=vmem, size = 0x2000, scoped, tag = 'output window, operand 0']
    %8 = vsyncpa [#allocation4], 0
    %s9 = scalar_lea.sflag [#allocation4], 1
    %10 = vsyncpa %s9, 0
    %11 = vsyncpa [#allocation7], 0
    %12 = vsyncpa [#allocation5], 0
    %s13 = scalar_lea.sflag [#allocation5], 1
    %14 = vsyncpa %s13, 0
    loop: start=0, step=1, limit=6
    $region2: #{tpu_custom_call.1} parent=1 // loop_pre_header
      _
    $region3: #{tpu_custom_call.1} parent=1 // loop_header
      %s16 = sphi 0, %s20
      %p17 = scmp.ge.s32.totalorder %s16, 6
      %s23 = sphi 0, %s35
      %s24 = sphi 0, %s31
      %s25 = sphi 0, %s23
      %s26 = sphi 0, %s24
      %s27 = sphi 0, %s25
      %s28 = sphi 0, %s26
      %s40 = sphi 0, %s42
      %s43 = sphi 0, %s40
      %s44 = sphi 0, %s43
      %s60 = sphi 0, %s44
      %s64 = sphi 0, %s64
      %s66 = sphi 0, %s64
      %s67 = sphi 0, %s66
      %s81 = sphi 0, %s67
      %s85 = sphi 0, %s85
      %s87 = sphi 0, %s85
      %s88 = sphi 0, %s87
      %s102 = sphi 0, %s88
      %s108 = sphi 0, %s110
      %s111 = sphi 0, %s108
      %s112 = sphi 0, %s111
      %s128 = sphi 0, %s112
    $region4: #{tpu_custom_call.1} parent=1 // loop_header_branch
      %19 = sbr.rel (%p17) target = $region8
    $region5: #{tpu_custom_call.1} parent=1 // loop_body
      %s21 = ssub.s32 %s16, 1
      %s22 = ssub.s32 %s16, 2
      %s29 = sadd.s32 1, %s24
      %p30 = scmp.ge.s32.totalorder %s29, 2
      %s31 = scalar_select %p30, 0, %s29
      %s32 = sadd.s32 1, %s23
      %s33 = scalar_select %p30, %s32, %s23
      %p34 = scmp.ge.s32.totalorder %s33, 2
      %s35 = scalar_select %p34, 0, %s33
      %s36 = ssub.s32 %s23, %s35
      %s37 = ssub.s32 %s24, %s31
      %s38 = sor.u32 %s36, %s37
      %p39 = scmp.eq.s32.totalorder %s38, 0
      %s41 = sadd.s32 %s40, 1
      %s42 = scalar_select %p39, %s40, %s41
      %p45 = pneg %p39
      %p46 = scmp.eq.s32.totalorder %s16, 3
      %p47 = por %p45, %p46
      %p48 = scmp.ne.s32.totalorder %s40, %s43
      %p49 = scmp.eq.s32.totalorder %s16, 0
      %p50 = por %p48, %p49
      %p51 = scmp.ne.s32.totalorder %s40, %s43
      %p52 = scmp.eq.s32.totalorder %s21, 3
      %p53 = por %p51, %p52
      %p54 = scmp.ne.s32.totalorder %s43, %s44
      %p55 = scmp.eq.s32.totalorder %s21, 0
      %p56 = por %p54, %p55
      %p57 = scmp.ne.s32.totalorder %s43, %s44
      %p58 = scmp.eq.s32.totalorder %s22, 3
      %p59 = por %p57, %p58
      %p61 = scmp.ne.s32.totalorder %s44, %s60
      %p62 = scmp.eq.s32.totalorder %s22, 0
      %p63 = por %p61, %p62
      %s65 = sadd.s32 %s64, 1
      %p68 = scmp.eq.s32.totalorder %s16, 3
      %p69 = scmp.ne.s32.totalorder %s64, %s66
      %p70 = scmp.eq.s32.totalorder %s16, 0
      %p71 = por %p69, %p70
      %p72 = scmp.ne.s32.totalorder %s64, %s66
      %p73 = scmp.eq.s32.totalorder %s21, 3
      %p74 = por %p72, %p73
      %p75 = scmp.ne.s32.totalorder %s66, %s67
      %p76 = scmp.eq.s32.totalorder %s21, 0
      %p77 = por %p75, %p76
      %p78 = scmp.ne.s32.totalorder %s66, %s67
      %p79 = scmp.eq.s32.totalorder %s22, 3
      %p80 = por %p78, %p79
      %p82 = scmp.ne.s32.totalorder %s67, %s81
      %p83 = scmp.eq.s32.totalorder %s22, 0
      %p84 = por %p82, %p83
      %s86 = sadd.s32 %s85, 1
      %p89 = scmp.eq.s32.totalorder %s16, 3
      %p90 = scmp.ne.s32.totalorder %s85, %s87
      %p91 = scmp.eq.s32.totalorder %s16, 0
      %p92 = por %p90, %p91
      %p93 = scmp.ne.s32.totalorder %s85, %s87
      %p94 = scmp.eq.s32.totalorder %s21, 3
      %p95 = por %p93, %p94
      %p96 = scmp.ne.s32.totalorder %s87, %s88
      %p97 = scmp.eq.s32.totalorder %s21, 0
      %p98 = por %p96, %p97
      %p99 = scmp.ne.s32.totalorder %s87, %s88
      %p100 = scmp.eq.s32.totalorder %s22, 3
      %p101 = por %p99, %p100
      %p103 = scmp.ne.s32.totalorder %s88, %s102
      %p104 = scmp.eq.s32.totalorder %s22, 0
      %p105 = por %p103, %p104
      %s106 = ssub.s32 %s23, %s35
      %p107 = scmp.eq.s32.totalorder %s106, 0
      %s109 = sadd.s32 %s108, 1
      %s110 = scalar_select %p107, %s108, %s109
      %p113 = pneg %p107
      %p114 = scmp.eq.s32.totalorder %s16, 3
      %p115 = por %p113, %p114
      %p116 = scmp.ne.s32.totalorder %s108, %s111
      %p117 = scmp.eq.s32.totalorder %s16, 0
      %p118 = por %p116, %p117
      %p119 = scmp.ne.s32.totalorder %s108, %s111
      %p120 = scmp.eq.s32.totalorder %s21, 3
      %p121 = por %p119, %p120
      %p122 = scmp.ne.s32.totalorder %s111, %s112
      %p123 = scmp.eq.s32.totalorder %s21, 0
      %p124 = por %p122, %p123
      %p125 = scmp.ne.s32.totalorder %s111, %s112
      %p126 = scmp.eq.s32.totalorder %s22, 3
      %p127 = por %p125, %p126
      %p129 = scmp.ne.s32.totalorder %s112, %s128
      %p130 = scmp.eq.s32.totalorder %s22, 0
      %p131 = por %p129, %p130
      %p132 = scmp.le.s32.totalorder 1, %s16
      %p133 = scmp.lt.s32.totalorder %s16, 5
      %p134 = pnand %p132, %p133
      %p135 = pneg %p134
      // Predicated region
      $region9: #{tpu_custom_call.1} parent=5 // pred_check
        _
      $region10: #{tpu_custom_call.1} parent=5 // pred_check_branch
        %137 = sbr.rel (%p134) target = $region12
      $region11: #{tpu_custom_call.1} parent=5 // pred_region
        %s138 = ssub.s32 %s16, 1
        // Predicated region
        $region13: #{tpu_custom_call.1} parent=11 // pred_check
          %p139 = pneg %p77
        $region14: #{tpu_custom_call.1} parent=11 // pred_check_branch
          %141 = sbr.rel (%p139) target = $region16
        $region15: #{tpu_custom_call.1} parent=11 // pred_region
          _
        $region16: #{tpu_custom_call.1} parent=11 // pred_fallthru
          _
        // Predicated region
        $region17: #{tpu_custom_call.1} parent=11 // pred_check
          %p142 = pneg %p98
        $region18: #{tpu_custom_call.1} parent=11 // pred_check_branch
          %144 = sbr.rel (%p142) target = $region20
        $region19: #{tpu_custom_call.1} parent=11 // pred_region
          %146 = vsyncadd [#allocation7], 0
          %s148 = sshll.u32 %s2, 4
          %s149 = int_to_ptr.hbm [resolvable:$true] %s148
          %s150 = sshll.u32 [#allocation6], 4
          %s151 = int_to_ptr.vmem [resolvable:$true] %s150
          %153 = dma.hbm_to_vmem [thread:$0]  %s149, 16, %s151, [#allocation7]
        $region20: #{tpu_custom_call.1} parent=11 // pred_fallthru
          _
      $region12: #{tpu_custom_call.1} parent=5 // pred_fallthru
        _
      %p154 = scmp.lt.s32.totalorder %s16, 4
      // Predicated region
      $region21: #{tpu_custom_call.1} parent=5 // pred_check
        %p155 = pneg %p154
      $region22: #{tpu_custom_call.1} parent=5 // pred_check_branch
        %157 = sbr.rel (%p155) target = $region24
      $region23: #{tpu_custom_call.1} parent=5 // pred_region
        // Predicated region
        $region25: #{tpu_custom_call.1} parent=23 // pred_check
          %p158 = pneg %p50
        $region26: #{tpu_custom_call.1} parent=23 // pred_check_branch
          %160 = sbr.rel (%p158) target = $region28
        $region27: #{tpu_custom_call.1} parent=23 // pred_region
          %s161 = sand.u32 %s40, 1
          %s162 = scalar_lea.sflag [#allocation4], %s161
          %s163 = sand.u32 %s40, 1
          %s164 = smul.addr %s163, 1024
          %s165 = scalar_lea.vmem [#allocation3], %s164
          %s166 = smul.u32 8, %s23
          %168 = vsyncadd %s162, 0
          %s169 = smul.addr %s166, 32
          %s170 = sadd.s32 %s24, %s169
          %s171 = smul.addr %s170, 8
          %s172 = scalar_lea.hbm %s0, %s171
          %s173 = sshll.u32 %s172, 4
          %s174 = int_to_ptr.hbm [resolvable:$true] %s173
          %s175 = sshll.u32 %s165, 4
          %s176 = int_to_ptr.vmem [resolvable:$true] %s175
          %181 = dma.hbm_to_vmem [thread:$0]  %s174, 16384, %s176, %s162, 256, 128, 8
        $region28: #{tpu_custom_call.1} parent=23 // pred_fallthru
          _
      $region24: #{tpu_custom_call.1} parent=5 // pred_fallthru
        _
      %p182 = scmp.le.s32.totalorder 1, %s16
      %p183 = scmp.lt.s32.totalorder %s16, 5
      %p184 = pnand %p182, %p183
      %p185 = pneg %p184
      // Predicated region
      $region29: #{tpu_custom_call.1} parent=5 // pred_check
        _
      $region30: #{tpu_custom_call.1} parent=5 // pred_check_branch
        %187 = sbr.rel (%p184) target = $region32
      $region31: #{tpu_custom_call.1} parent=5 // pred_region
        %s188 = ssub.s32 %s16, 1
        %s189 = sand.u32 %s43, 1
        %s190 = scalar_lea.sflag [#allocation4], %s189
        %s191 = sand.u32 %s43, 1
        %s192 = smul.addr %s191, 1024
        %s193 = scalar_lea.vmem [#allocation3], %s192
        // Predicated region
        $region33: #{tpu_custom_call.1} parent=31 // pred_check
          %p194 = pneg %p56
        $region34: #{tpu_custom_call.1} parent=31 // pred_check_branch
          %196 = sbr.rel (%p194) target = $region36
        $region35: #{tpu_custom_call.1} parent=31 // pred_region
          %198 = dma.done %s190, 16384
        $region36: #{tpu_custom_call.1} parent=31 // pred_fallthru
          _
        // Predicated region
        $region37: #{tpu_custom_call.1} parent=31 // pred_check
          %p199 = pneg %p98
        $region38: #{tpu_custom_call.1} parent=31 // pred_check_branch
          %201 = sbr.rel (%p199) target = $region40
        $region39: #{tpu_custom_call.1} parent=31 // pred_region
          %203 = dma.done [#allocation7], 16
        $region40: #{tpu_custom_call.1} parent=31 // pred_fallthru
          _
        %s204 = sand.u32 %s43, 1
        %s205 = scalar_lea.sflag [#allocation4], %s204
        %s206 = sand.u32 %s43, 1
        %s207 = smul.addr %s206, 1024
        %s208 = scalar_lea.vmem [#allocation3], %s207
        %p209 = pneg %p56
        %p210 = pneg %p53
        %p211 = pneg %p77
        %p212 = pneg %p74
        %p213 = pneg %p98
        %p214 = pneg %p95
        %p215 = pneg %p124
        %p216 = pneg %p121
        %s217 = sand.u32 %s111, 1
        %s218 = scalar_lea.sflag [#allocation5], %s217
        %s219 = sand.u32 %s111, 1
        %s220 = smul.addr %s219, 8
        %s221 = scalar_lea.vmem [#allocation8], %s220
        %s222 = smul.u32 8, %s25
        %p223 = scmp.eq.s32.totalorder %s26, 0
        // Predicated region
        $region41: #{tpu_custom_call.1} parent=31 // pred_check
          %p224 = pneg %p223
        $region42: #{tpu_custom_call.1} parent=31 // pred_check_branch
          %226 = sbr.rel (%p224) target = $region44
        $region43: #{tpu_custom_call.1} parent=31 // pred_region
          %227 = vst [vmem:[#allocation2] sm:$0xff] 0.0
        $region44: #{tpu_custom_call.1} parent=31 // pred_fallthru
          _
        %v228 = vld [vmem:[#allocation2] sm:$0xff]
        %v229 = vld [vmem:[%s193] sm:$0xff]
        %v230 = vld [vmem:[%s193 + $0x8] sm:$0xff]
        %v231 = vld [vmem:[%s193 + $0x10] sm:$0xff]
        %v232 = vld [vmem:[%s193 + $0x18] sm:$0xff]
        %v233 = vld [vmem:[%s193 + $0x20] sm:$0xff]
        %v234 = vld [vmem:[%s193 + $0x28] sm:$0xff]
        %v235 = vld [vmem:[%s193 + $0x30] sm:$0xff]
        %v236 = vld [vmem:[%s193 + $0x38] sm:$0xff]
        %v237 = vld [vmem:[%s193 + $0x40] sm:$0xff]
        %v238 = vld [vmem:[%s193 + $0x48] sm:$0xff]
        %v239 = vld [vmem:[%s193 + $0x50] sm:$0xff]
        %v240 = vld [vmem:[%s193 + $0x58] sm:$0xff]
        %v241 = vld [vmem:[%s193 + $0x60] sm:$0xff]
        %v242 = vld [vmem:[%s193 + $0x68] sm:$0xff]
        %v243 = vld [vmem:[%s193 + $0x70] sm:$0xff]
        %v244 = vld [vmem:[%s193 + $0x78] sm:$0xff]
        %v245 = vld [vmem:[%s193 + $0x80] sm:$0xff]
        %v246 = vld [vmem:[%s193 + $0x88] sm:$0xff]
        %v247 = vld [vmem:[%s193 + $0x90] sm:$0xff]
        %v248 = vld [vmem:[%s193 + $0x98] sm:$0xff]
        %v249 = vld [vmem:[%s193 + $0xa0] sm:$0xff]
        %v250 = vld [vmem:[%s193 + $0xa8] sm:$0xff]
        %v251 = vld [vmem:[%s193 + $0xb0] sm:$0xff]
        %v252 = vld [vmem:[%s193 + $0xb8] sm:$0xff]
        %v253 = vld [vmem:[%s193 + $0xc0] sm:$0xff]
        %v254 = vld [vmem:[%s193 + $0xc8] sm:$0xff]
        %v255 = vld [vmem:[%s193 + $0xd0] sm:$0xff]
        %v256 = vld [vmem:[%s193 + $0xd8] sm:$0xff]
        %v257 = vld [vmem:[%s193 + $0xe0] sm:$0xff]
        %v258 = vld [vmem:[%s193 + $0xe8] sm:$0xff]
        %v259 = vld [vmem:[%s193 + $0xf0] sm:$0xff]
        %v260 = vld [vmem:[%s193 + $0xf8] sm:$0xff]
        %v261 = vld [vmem:[%s193 + $0x100] sm:$0xff]
        %v262 = vld [vmem:[%s193 + $0x108] sm:$0xff]
        %v263 = vld [vmem:[%s193 + $0x110] sm:$0xff]
        %v264 = vld [vmem:[%s193 + $0x118] sm:$0xff]
        %v265 = vld [vmem:[%s193 + $0x120] sm:$0xff]
        %v266 = vld [vmem:[%s193 + $0x128] sm:$0xff]
        %v267 = vld [vmem:[%s193 + $0x130] sm:$0xff]
        %v268 = vld [vmem:[%s193 + $0x138] sm:$0xff]
        %v269 = vld [vmem:[%s193 + $0x140] sm:$0xff]
        %v270 = vld [vmem:[%s193 + $0x148] sm:$0xff]
        %v271 = vld [vmem:[%s193 + $0x150] sm:$0xff]
        %v272 = vld [vmem:[%s193 + $0x158] sm:$0xff]
        %v273 = vld [vmem:[%s193 + $0x160] sm:$0xff]
        %v274 = vld [vmem:[%s193 + $0x168] sm:$0xff]
        %v275 = vld [vmem:[%s193 + $0x170] sm:$0xff]
        %v276 = vld [vmem:[%s193 + $0x178] sm:$0xff]
        %v277 = vld [vmem:[%s193 + $0x180] sm:$0xff]
        %v278 = vld [vmem:[%s193 + $0x188] sm:$0xff]
        %v279 = vld [vmem:[%s193 + $0x190] sm:$0xff]
        %v280 = vld [vmem:[%s193 + $0x198] sm:$0xff]
        %v281 = vld [vmem:[%s193 + $0x1a0] sm:$0xff]
        %v282 = vld [vmem:[%s193 + $0x1a8] sm:$0xff]
        %v283 = vld [vmem:[%s193 + $0x1b0] sm:$0xff]
        %v284 = vld [vmem:[%s193 + $0x1b8] sm:$0xff]
        %v285 = vld [vmem:[%s193 + $0x1c0] sm:$0xff]
        %v286 = vld [vmem:[%s193 + $0x1c8] sm:$0xff]
        %v287 = vld [vmem:[%s193 + $0x1d0] sm:$0xff]
        %v288 = vld [vmem:[%s193 + $0x1d8] sm:$0xff]
        %v289 = vld [vmem:[%s193 + $0x1e0] sm:$0xff]
        %v290 = vld [vmem:[%s193 + $0x1e8] sm:$0xff]
        %v291 = vld [vmem:[%s193 + $0x1f0] sm:$0xff]
        %v292 = vld [vmem:[%s193 + $0x1f8] sm:$0xff]
        %v293 = vld [vmem:[%s193 + $0x200] sm:$0xff]
        %v294 = vld [vmem:[%s193 + $0x208] sm:$0xff]
        %v295 = vld [vmem:[%s193 + $0x210] sm:$0xff]
        %v296 = vld [vmem:[%s193 + $0x218] sm:$0xff]
        %v297 = vld [vmem:[%s193 + $0x220] sm:$0xff]
        %v298 = vld [vmem:[%s193 + $0x228] sm:$0xff]
        %v299 = vld [vmem:[%s193 + $0x230] sm:$0xff]
        %v300 = vld [vmem:[%s193 + $0x238] sm:$0xff]
        %v301 = vld [vmem:[%s193 + $0x240] sm:$0xff]
        %v302 = vld [vmem:[%s193 + $0x248] sm:$0xff]
        %v303 = vld [vmem:[%s193 + $0x250] sm:$0xff]
        %v304 = vld [vmem:[%s193 + $0x258] sm:$0xff]
        %v305 = vld [vmem:[%s193 + $0x260] sm:$0xff]
        %v306 = vld [vmem:[%s193 + $0x268] sm:$0xff]
        %v307 = vld [vmem:[%s193 + $0x270] sm:$0xff]
        %v308 = vld [vmem:[%s193 + $0x278] sm:$0xff]
        %v309 = vld [vmem:[%s193 + $0x280] sm:$0xff]
        %v310 = vld [vmem:[%s193 + $0x288] sm:$0xff]
        %v311 = vld [vmem:[%s193 + $0x290] sm:$0xff]
        %v312 = vld [vmem:[%s193 + $0x298] sm:$0xff]
        %v313 = vld [vmem:[%s193 + $0x2a0] sm:$0xff]
        %v314 = vld [vmem:[%s193 + $0x2a8] sm:$0xff]
        %v315 = vld [vmem:[%s193 + $0x2b0] sm:$0xff]
        %v316 = vld [vmem:[%s193 + $0x2b8] sm:$0xff]
        %v317 = vld [vmem:[%s193 + $0x2c0] sm:$0xff]
        %v318 = vld [vmem:[%s193 + $0x2c8] sm:$0xff]
        %v319 = vld [vmem:[%s193 + $0x2d0] sm:$0xff]
        %v320 = vld [vmem:[%s193 + $0x2d8] sm:$0xff]
        %v321 = vld [vmem:[%s193 + $0x2e0] sm:$0xff]
        %v322 = vld [vmem:[%s193 + $0x2e8] sm:$0xff]
        %v323 = vld [vmem:[%s193 + $0x2f0] sm:$0xff]
        %v324 = vld [vmem:[%s193 + $0x2f8] sm:$0xff]
        %v325 = vld [vmem:[%s193 + $0x300] sm:$0xff]
        %v326 = vld [vmem:[%s193 + $0x308] sm:$0xff]
        %v327 = vld [vmem:[%s193 + $0x310] sm:$0xff]
        %v328 = vld [vmem:[%s193 + $0x318] sm:$0xff]
        %v329 = vld [vmem:[%s193 + $0x320] sm:$0xff]
        %v330 = vld [vmem:[%s193 + $0x328] sm:$0xff]
        %v331 = vld [vmem:[%s193 + $0x330] sm:$0xff]
        %v332 = vld [vmem:[%s193 + $0x338] sm:$0xff]
        %v333 = vld [vmem:[%s193 + $0x340] sm:$0xff]
        %v334 = vld [vmem:[%s193 + $0x348] sm:$0xff]
        %v335 = vld [vmem:[%s193 + $0x350] sm:$0xff]
        %v336 = vld [vmem:[%s193 + $0x358] sm:$0xff]
        %v337 = vld [vmem:[%s193 + $0x360] sm:$0xff]
        %v338 = vld [vmem:[%s193 + $0x368] sm:$0xff]
        %v339 = vld [vmem:[%s193 + $0x370] sm:$0xff]
        %v340 = vld [vmem:[%s193 + $0x378] sm:$0xff]
        %v341 = vld [vmem:[%s193 + $0x380] sm:$0xff]
        %v342 = vld [vmem:[%s193 + $0x388] sm:$0xff]
        %v343 = vld [vmem:[%s193 + $0x390] sm:$0xff]
        %v344 = vld [vmem:[%s193 + $0x398] sm:$0xff]
        %v345 = vld [vmem:[%s193 + $0x3a0] sm:$0xff]
        %v346 = vld [vmem:[%s193 + $0x3a8] sm:$0xff]
        %v347 = vld [vmem:[%s193 + $0x3b0] sm:$0xff]
        %v348 = vld [vmem:[%s193 + $0x3b8] sm:$0xff]
        %v349 = vld [vmem:[%s193 + $0x3c0] sm:$0xff]
        %v350 = vld [vmem:[%s193 + $0x3c8] sm:$0xff]
        %v351 = vld [vmem:[%s193 + $0x3d0] sm:$0xff]
        %v352 = vld [vmem:[%s193 + $0x3d8] sm:$0xff]
        %v353 = vld [vmem:[%s193 + $0x3e0] sm:$0xff]
        %v354 = vld [vmem:[%s193 + $0x3e8] sm:$0xff]
        %v355 = vld [vmem:[%s193 + $0x3f0] sm:$0xff]
        %v356 = vld [vmem:[%s193 + $0x3f8] sm:$0xff]
        %357 = vadd.xlane.f32.xlu0 %v229
        %v358 = vpop.xlane.xlu0 %357
        %359 = vadd.xlane.f32.xlu0 %v230
        %v360 = vpop.xlane.xlu0 %359
        %361 = vadd.xlane.f32.xlu0 %v231
        %v362 = vpop.xlane.xlu0 %361
        %363 = vadd.xlane.f32.xlu0 %v232
        %v364 = vpop.xlane.xlu0 %363
        %365 = vadd.xlane.f32.xlu0 %v233
        %v366 = vpop.xlane.xlu0 %365
        %367 = vadd.xlane.f32.xlu0 %v234
        %v368 = vpop.xlane.xlu0 %367
        %369 = vadd.xlane.f32.xlu0 %v235
        %v370 = vpop.xlane.xlu0 %369
        %371 = vadd.xlane.f32.xlu0 %v236
        %v372 = vpop.xlane.xlu0 %371
        %373 = vadd.xlane.f32.xlu0 %v237
        %v374 = vpop.xlane.xlu0 %373
        %375 = vadd.xlane.f32.xlu0 %v238
        %v376 = vpop.xlane.xlu0 %375
        %377 = vadd.xlane.f32.xlu0 %v239
        %v378 = vpop.xlane.xlu0 %377
        %379 = vadd.xlane.f32.xlu0 %v240
        %v380 = vpop.xlane.xlu0 %379
        %381 = vadd.xlane.f32.xlu0 %v241
        %v382 = vpop.xlane.xlu0 %381
        %383 = vadd.xlane.f32.xlu0 %v242
        %v384 = vpop.xlane.xlu0 %383
        %385 = vadd.xlane.f32.xlu0 %v243
        %v386 = vpop.xlane.xlu0 %385
        %387 = vadd.xlane.f32.xlu0 %v244
        %v388 = vpop.xlane.xlu0 %387
        %389 = vadd.xlane.f32.xlu0 %v245
        %v390 = vpop.xlane.xlu0 %389
        %391 = vadd.xlane.f32.xlu0 %v246
        %v392 = vpop.xlane.xlu0 %391
        %393 = vadd.xlane.f32.xlu0 %v247
        %v394 = vpop.xlane.xlu0 %393
        %395 = vadd.xlane.f32.xlu0 %v248
        %v396 = vpop.xlane.xlu0 %395
        %397 = vadd.xlane.f32.xlu0 %v249
        %v398 = vpop.xlane.xlu0 %397
        %399 = vadd.xlane.f32.xlu0 %v250
        %v400 = vpop.xlane.xlu0 %399
        %401 = vadd.xlane.f32.xlu0 %v251
        %v402 = vpop.xlane.xlu0 %401
        %403 = vadd.xlane.f32.xlu0 %v252
        %v404 = vpop.xlane.xlu0 %403
        %405 = vadd.xlane.f32.xlu0 %v253
        %v406 = vpop.xlane.xlu0 %405
        %407 = vadd.xlane.f32.xlu0 %v254
        %v408 = vpop.xlane.xlu0 %407
        %409 = vadd.xlane.f32.xlu0 %v255
        %v410 = vpop.xlane.xlu0 %409
        %411 = vadd.xlane.f32.xlu0 %v256
        %v412 = vpop.xlane.xlu0 %411
        %413 = vadd.xlane.f32.xlu0 %v257
        %v414 = vpop.xlane.xlu0 %413
        %415 = vadd.xlane.f32.xlu0 %v258
        %v416 = vpop.xlane.xlu0 %415
        %417 = vadd.xlane.f32.xlu0 %v259
        %v418 = vpop.xlane.xlu0 %417
        %419 = vadd.xlane.f32.xlu0 %v260
        %v420 = vpop.xlane.xlu0 %419
        %421 = vadd.xlane.f32.xlu0 %v261
        %v422 = vpop.xlane.xlu0 %421
        %423 = vadd.xlane.f32.xlu0 %v262
        %v424 = vpop.xlane.xlu0 %423
        %425 = vadd.xlane.f32.xlu0 %v263
        %v426 = vpop.xlane.xlu0 %425
        %427 = vadd.xlane.f32.xlu0 %v264
        %v428 = vpop.xlane.xlu0 %427
        %429 = vadd.xlane.f32.xlu0 %v265
        %v430 = vpop.xlane.xlu0 %429
        %431 = vadd.xlane.f32.xlu0 %v266
        %v432 = vpop.xlane.xlu0 %431
        %433 = vadd.xlane.f32.xlu0 %v267
        %v434 = vpop.xlane.xlu0 %433
        %435 = vadd.xlane.f32.xlu0 %v268
        %v436 = vpop.xlane.xlu0 %435
        %437 = vadd.xlane.f32.xlu0 %v269
        %v438 = vpop.xlane.xlu0 %437
        %439 = vadd.xlane.f32.xlu0 %v270
        %v440 = vpop.xlane.xlu0 %439
        %441 = vadd.xlane.f32.xlu0 %v271
        %v442 = vpop.xlane.xlu0 %441
        %443 = vadd.xlane.f32.xlu0 %v272
        %v444 = vpop.xlane.xlu0 %443
        %445 = vadd.xlane.f32.xlu0 %v273
        %v446 = vpop.xlane.xlu0 %445
        %447 = vadd.xlane.f32.xlu0 %v274
        %v448 = vpop.xlane.xlu0 %447
        %449 = vadd.xlane.f32.xlu0 %v275
        %v450 = vpop.xlane.xlu0 %449
        %451 = vadd.xlane.f32.xlu0 %v276
        %v452 = vpop.xlane.xlu0 %451
        %453 = vadd.xlane.f32.xlu0 %v277
        %v454 = vpop.xlane.xlu0 %453
        %455 = vadd.xlane.f32.xlu0 %v278
        %v456 = vpop.xlane.xlu0 %455
        %457 = vadd.xlane.f32.xlu0 %v279
        %v458 = vpop.xlane.xlu0 %457
        %459 = vadd.xlane.f32.xlu0 %v280
        %v460 = vpop.xlane.xlu0 %459
        %461 = vadd.xlane.f32.xlu0 %v281
        %v462 = vpop.xlane.xlu0 %461
        %463 = vadd.xlane.f32.xlu0 %v282
        %v464 = vpop.xlane.xlu0 %463
        %465 = vadd.xlane.f32.xlu0 %v283
        %v466 = vpop.xlane.xlu0 %465
        %467 = vadd.xlane.f32.xlu0 %v284
        %v468 = vpop.xlane.xlu0 %467
        %469 = vadd.xlane.f32.xlu0 %v285
        %v470 = vpop.xlane.xlu0 %469
        %471 = vadd.xlane.f32.xlu0 %v286
        %v472 = vpop.xlane.xlu0 %471
        %473 = vadd.xlane.f32.xlu0 %v287
        %v474 = vpop.xlane.xlu0 %473
        %475 = vadd.xlane.f32.xlu0 %v288
        %v476 = vpop.xlane.xlu0 %475
        %477 = vadd.xlane.f32.xlu0 %v289
        %v478 = vpop.xlane.xlu0 %477
        %479 = vadd.xlane.f32.xlu0 %v290
        %v480 = vpop.xlane.xlu0 %479
        %481 = vadd.xlane.f32.xlu0 %v291
        %v482 = vpop.xlane.xlu0 %481
        %483 = vadd.xlane.f32.xlu0 %v292
        %v484 = vpop.xlane.xlu0 %483
        %485 = vadd.xlane.f32.xlu0 %v293
        %v486 = vpop.xlane.xlu0 %485
        %487 = vadd.xlane.f32.xlu0 %v294
        %v488 = vpop.xlane.xlu0 %487
        %489 = vadd.xlane.f32.xlu0 %v295
        %v490 = vpop.xlane.xlu0 %489
        %491 = vadd.xlane.f32.xlu0 %v296
        %v492 = vpop.xlane.xlu0 %491
        %493 = vadd.xlane.f32.xlu0 %v297
        %v494 = vpop.xlane.xlu0 %493
        %495 = vadd.xlane.f32.xlu0 %v298
        %v496 = vpop.xlane.xlu0 %495
        %497 = vadd.xlane.f32.xlu0 %v299
        %v498 = vpop.xlane.xlu0 %497
        %499 = vadd.xlane.f32.xlu0 %v300
        %v500 = vpop.xlane.xlu0 %499
        %501 = vadd.xlane.f32.xlu0 %v301
        %v502 = vpop.xlane.xlu0 %501
        %503 = vadd.xlane.f32.xlu0 %v302
        %v504 = vpop.xlane.xlu0 %503
        %505 = vadd.xlane.f32.xlu0 %v303
        %v506 = vpop.xlane.xlu0 %505
        %507 = vadd.xlane.f32.xlu0 %v304
        %v508 = vpop.xlane.xlu0 %507
        %509 = vadd.xlane.f32.xlu0 %v305
        %v510 = vpop.xlane.xlu0 %509
        %511 = vadd.xlane.f32.xlu0 %v306
        %v512 = vpop.xlane.xlu0 %511
        %513 = vadd.xlane.f32.xlu0 %v307
        %v514 = vpop.xlane.xlu0 %513
        %515 = vadd.xlane.f32.xlu0 %v308
        %v516 = vpop.xlane.xlu0 %515
        %517 = vadd.xlane.f32.xlu0 %v309
        %v518 = vpop.xlane.xlu0 %517
        %519 = vadd.xlane.f32.xlu0 %v310
        %v520 = vpop.xlane.xlu0 %519
        %521 = vadd.xlane.f32.xlu0 %v311
        %v522 = vpop.xlane.xlu0 %521
        %523 = vadd.xlane.f32.xlu0 %v312
        %v524 = vpop.xlane.xlu0 %523
        %525 = vadd.xlane.f32.xlu0 %v313
        %v526 = vpop.xlane.xlu0 %525
        %527 = vadd.xlane.f32.xlu0 %v314
        %v528 = vpop.xlane.xlu0 %527
        %529 = vadd.xlane.f32.xlu0 %v315
        %v530 = vpop.xlane.xlu0 %529
        %531 = vadd.xlane.f32.xlu0 %v316
        %v532 = vpop.xlane.xlu0 %531
        %533 = vadd.xlane.f32.xlu0 %v317
        %v534 = vpop.xlane.xlu0 %533
        %535 = vadd.xlane.f32.xlu0 %v318
        %v536 = vpop.xlane.xlu0 %535
        %537 = vadd.xlane.f32.xlu0 %v319
        %v538 = vpop.xlane.xlu0 %537
        %539 = vadd.xlane.f32.xlu0 %v320
        %v540 = vpop.xlane.xlu0 %539
        %541 = vadd.xlane.f32.xlu0 %v321
        %v542 = vpop.xlane.xlu0 %541
        %543 = vadd.xlane.f32.xlu0 %v322
        %v544 = vpop.xlane.xlu0 %543
        %545 = vadd.xlane.f32.xlu0 %v323
        %v546 = vpop.xlane.xlu0 %545
        %547 = vadd.xlane.f32.xlu0 %v324
        %v548 = vpop.xlane.xlu0 %547
        %549 = vadd.xlane.f32.xlu0 %v325
        %v550 = vpop.xlane.xlu0 %549
        %551 = vadd.xlane.f32.xlu0 %v326
        %v552 = vpop.xlane.xlu0 %551
        %553 = vadd.xlane.f32.xlu0 %v327
        %v554 = vpop.xlane.xlu0 %553
        %555 = vadd.xlane.f32.xlu0 %v328
        %v556 = vpop.xlane.xlu0 %555
        %557 = vadd.xlane.f32.xlu0 %v329
        %v558 = vpop.xlane.xlu0 %557
        %559 = vadd.xlane.f32.xlu0 %v330
        %v560 = vpop.xlane.xlu0 %559
        %561 = vadd.xlane.f32.xlu0 %v331
        %v562 = vpop.xlane.xlu0 %561
        %563 = vadd.xlane.f32.xlu0 %v332
        %v564 = vpop.xlane.xlu0 %563
        %565 = vadd.xlane.f32.xlu0 %v333
        %v566 = vpop.xlane.xlu0 %565
        %567 = vadd.xlane.f32.xlu0 %v334
        %v568 = vpop.xlane.xlu0 %567
        %569 = vadd.xlane.f32.xlu0 %v335
        %v570 = vpop.xlane.xlu0 %569
        %571 = vadd.xlane.f32.xlu0 %v336
        %v572 = vpop.xlane.xlu0 %571
        %573 = vadd.xlane.f32.xlu0 %v337
        %v574 = vpop.xlane.xlu0 %573
        %575 = vadd.xlane.f32.xlu0 %v338
        %v576 = vpop.xlane.xlu0 %575
        %577 = vadd.xlane.f32.xlu0 %v339
        %v578 = vpop.xlane.xlu0 %577
        %579 = vadd.xlane.f32.xlu0 %v340
        %v580 = vpop.xlane.xlu0 %579
        %581 = vadd.xlane.f32.xlu0 %v341
        %v582 = vpop.xlane.xlu0 %581
        %583 = vadd.xlane.f32.xlu0 %v342
        %v584 = vpop.xlane.xlu0 %583
        %585 = vadd.xlane.f32.xlu0 %v343
        %v586 = vpop.xlane.xlu0 %585
        %587 = vadd.xlane.f32.xlu0 %v344
        %v588 = vpop.xlane.xlu0 %587
        %589 = vadd.xlane.f32.xlu0 %v345
        %v590 = vpop.xlane.xlu0 %589
        %591 = vadd.xlane.f32.xlu0 %v346
        %v592 = vpop.xlane.xlu0 %591
        %593 = vadd.xlane.f32.xlu0 %v347
        %v594 = vpop.xlane.xlu0 %593
        %595 = vadd.xlane.f32.xlu0 %v348
        %v596 = vpop.xlane.xlu0 %595
        %597 = vadd.xlane.f32.xlu0 %v349
        %v598 = vpop.xlane.xlu0 %597
        %599 = vadd.xlane.f32.xlu0 %v350
        %v600 = vpop.xlane.xlu0 %599
        %601 = vadd.xlane.f32.xlu0 %v351
        %v602 = vpop.xlane.xlu0 %601
        %603 = vadd.xlane.f32.xlu0 %v352
        %v604 = vpop.xlane.xlu0 %603
        %605 = vadd.xlane.f32.xlu0 %v353
        %v606 = vpop.xlane.xlu0 %605
        %607 = vadd.xlane.f32.xlu0 %v354
        %v608 = vpop.xlane.xlu0 %607
        %609 = vadd.xlane.f32.xlu0 %v355
        %v610 = vpop.xlane.xlu0 %609
        %611 = vadd.xlane.f32.xlu0 %v356
        %v612 = vpop.xlane.xlu0 %611
        %v741 = vlaneseq
        %v742 = vand.u32 %v741, 127
        %v743 = vperm.slane %v358, %v742
        %v744 = vadd.s32 %v742, 4294967288
        %v745 = vperm.slane %v360, %v744
        %vm746 = vcmask 130112
        %v747 = vsel %vm746, %v745, %v743
        %v748 = vadd.s32 %v742, 4294967280
        %v749 = vperm.slane %v362, %v748
        %vm750 = vcmask 195712
        %v751 = vsel %vm750, %v749, %v747
        %v752 = vadd.s32 %v742, 4294967272
        %v753 = vperm.slane %v364, %v752
        %vm754 = vcmask 261312
        %v755 = vsel %vm754, %v753, %v751
        %v756 = vadd.s32 %v742, 4294967264
        %v757 = vperm.slane %v366, %v756
        %vm758 = vcmask 326912
        %v759 = vsel %vm758, %v757, %v755
        %v760 = vadd.s32 %v742, 4294967256
        %v761 = vperm.slane %v368, %v760
        %vm762 = vcmask 392512
        %v763 = vsel %vm762, %v761, %v759
        %v764 = vadd.s32 %v742, 4294967248
        %v765 = vperm.slane %v370, %v764
        %vm766 = vcmask 458112
        %v767 = vsel %vm766, %v765, %v763
        %v768 = vadd.s32 %v742, 4294967240
        %v769 = vperm.slane %v372, %v768
        %vm770 = vcmask 523712
        %v771 = vsel %vm770, %v769, %v767
        %v772 = vadd.s32 %v742, 4294967232
        %v773 = vperm.slane %v374, %v772
        %vm774 = vcmask 589312
        %v775 = vsel %vm774, %v773, %v771
        %v776 = vadd.s32 %v742, 4294967224
        %v777 = vperm.slane %v376, %v776
        %vm778 = vcmask 654912
        %v779 = vsel %vm778, %v777, %v775
        %v780 = vadd.s32 %v742, 4294967216
        %v781 = vperm.slane %v378, %v780
        %vm782 = vcmask 720512
        %v783 = vsel %vm782, %v781, %v779
        %v784 = vadd.s32 %v742, 4294967208
        %v785 = vperm.slane %v380, %v784
        %vm786 = vcmask 786112
        %v787 = vsel %vm786, %v785, %v783
        %v788 = vadd.s32 %v742, 4294967200
        %v789 = vperm.slane %v382, %v788
        %vm790 = vcmask 851712
        %v791 = vsel %vm790, %v789, %v787
        %v792 = vadd.s32 %v742, 4294967192
        %v793 = vperm.slane %v384, %v792
        %vm794 = vcmask 917312
        %v795 = vsel %vm794, %v793, %v791
        %v796 = vadd.s32 %v742, 4294967184
        %v797 = vperm.slane %v386, %v796
        %vm798 = vcmask 982912
        %v799 = vsel %vm798, %v797, %v795
        %v800 = vadd.s32 %v742, 4294967176
        %v801 = vperm.slane %v388, %v800
        %vm802 = vcmask 1048512
        %v803 = vsel %vm802, %v801, %v799
        %v804 = vperm.slane %v390, %v742
        %v805 = vperm.slane %v392, %v744
        %v806 = vsel %vm746, %v805, %v804
        %v807 = vperm.slane %v394, %v748
        %v808 = vsel %vm750, %v807, %v806
        %v809 = vperm.slane %v396, %v752
        %v810 = vsel %vm754, %v809, %v808
        %v811 = vperm.slane %v398, %v756
        %v812 = vsel %vm758, %v811, %v810
        %v813 = vperm.slane %v400, %v760
        %v814 = vsel %vm762, %v813, %v812
        %v815 = vperm.slane %v402, %v764
        %v816 = vsel %vm766, %v815, %v814
        %v817 = vperm.slane %v404, %v768
        %v818 = vsel %vm770, %v817, %v816
        %v819 = vperm.slane %v406, %v772
        %v820 = vsel %vm774, %v819, %v818
        %v821 = vperm.slane %v408, %v776
        %v822 = vsel %vm778, %v821, %v820
        %v823 = vperm.slane %v410, %v780
        %v824 = vsel %vm782, %v823, %v822
        %v825 = vperm.slane %v412, %v784
        %v826 = vsel %vm786, %v825, %v824
        %v827 = vperm.slane %v414, %v788
        %v828 = vsel %vm790, %v827, %v826
        %v829 = vperm.slane %v416, %v792
        %v830 = vsel %vm794, %v829, %v828
        %v831 = vperm.slane %v418, %v796
        %v832 = vsel %vm798, %v831, %v830
        %v833 = vperm.slane %v420, %v800
        %v834 = vsel %vm802, %v833, %v832
        %v835 = vperm.slane %v422, %v742
        %v836 = vperm.slane %v424, %v744
        %v837 = vsel %vm746, %v836, %v835
        %v838 = vperm.slane %v426, %v748
        %v839 = vsel %vm750, %v838, %v837
        %v840 = vperm.slane %v428, %v752
        %v841 = vsel %vm754, %v840, %v839
        %v842 = vperm.slane %v430, %v756
        %v843 = vsel %vm758, %v842, %v841
        %v844 = vperm.slane %v432, %v760
        %v845 = vsel %vm762, %v844, %v843
        %v846 = vperm.slane %v434, %v764
        %v847 = vsel %vm766, %v846, %v845
        %v848 = vperm.slane %v436, %v768
        %v849 = vsel %vm770, %v848, %v847
        %v850 = vperm.slane %v438, %v772
        %v851 = vsel %vm774, %v850, %v849
        %v852 = vperm.slane %v440, %v776
        %v853 = vsel %vm778, %v852, %v851
        %v854 = vperm.slane %v442, %v780
        %v855 = vsel %vm782, %v854, %v853
        %v856 = vperm.slane %v444, %v784
        %v857 = vsel %vm786, %v856, %v855
        %v858 = vperm.slane %v446, %v788
        %v859 = vsel %vm790, %v858, %v857
        %v860 = vperm.slane %v448, %v792
        %v861 = vsel %vm794, %v860, %v859
        %v862 = vperm.slane %v450, %v796
        %v863 = vsel %vm798, %v862, %v861
        %v864 = vperm.slane %v452, %v800
        %v865 = vsel %vm802, %v864, %v863
        %v866 = vperm.slane %v454, %v742
        %v867 = vperm.slane %v456, %v744
        %v868 = vsel %vm746, %v867, %v866
        %v869 = vperm.slane %v458, %v748
        %v870 = vsel %vm750, %v869, %v868
        %v871 = vperm.slane %v460, %v752
        %v872 = vsel %vm754, %v871, %v870
        %v873 = vperm.slane %v462, %v756
        %v874 = vsel %vm758, %v873, %v872
        %v875 = vperm.slane %v464, %v760
        %v876 = vsel %vm762, %v875, %v874
        %v877 = vperm.slane %v466, %v764
        %v878 = vsel %vm766, %v877, %v876
        %v879 = vperm.slane %v468, %v768
        %v880 = vsel %vm770, %v879, %v878
        %v881 = vperm.slane %v470, %v772
        %v882 = vsel %vm774, %v881, %v880
        %v883 = vperm.slane %v472, %v776
        %v884 = vsel %vm778, %v883, %v882
        %v885 = vperm.slane %v474, %v780
        %v886 = vsel %vm782, %v885, %v884
        %v887 = vperm.slane %v476, %v784
        %v888 = vsel %vm786, %v887, %v886
        %v889 = vperm.slane %v478, %v788
        %v890 = vsel %vm790, %v889, %v888
        %v891 = vperm.slane %v480, %v792
        %v892 = vsel %vm794, %v891, %v890
        %v893 = vperm.slane %v482, %v796
        %v894 = vsel %vm798, %v893, %v892
        %v895 = vperm.slane %v484, %v800
        %v896 = vsel %vm802, %v895, %v894
        %v897 = vperm.slane %v486, %v742
        %v898 = vperm.slane %v488, %v744
        %v899 = vsel %vm746, %v898, %v897
        %v900 = vperm.slane %v490, %v748
        %v901 = vsel %vm750, %v900, %v899
        %v902 = vperm.slane %v492, %v752
        %v903 = vsel %vm754, %v902, %v901
        %v904 = vperm.slane %v494, %v756
        %v905 = vsel %vm758, %v904, %v903
        %v906 = vperm.slane %v496, %v760
        %v907 = vsel %vm762, %v906, %v905
        %v908 = vperm.slane %v498, %v764
        %v909 = vsel %vm766, %v908, %v907
        %v910 = vperm.slane %v500, %v768
        %v911 = vsel %vm770, %v910, %v909
        %v912 = vperm.slane %v502, %v772
        %v913 = vsel %vm774, %v912, %v911
        %v914 = vperm.slane %v504, %v776
        %v915 = vsel %vm778, %v914, %v913
        %v916 = vperm.slane %v506, %v780
        %v917 = vsel %vm782, %v916, %v915
        %v918 = vperm.slane %v508, %v784
        %v919 = vsel %vm786, %v918, %v917
        %v920 = vperm.slane %v510, %v788
        %v921 = vsel %vm790, %v920, %v919
        %v922 = vperm.slane %v512, %v792
        %v923 = vsel %vm794, %v922, %v921
        %v924 = vperm.slane %v514, %v796
        %v925 = vsel %vm798, %v924, %v923
        %v926 = vperm.slane %v516, %v800
        %v927 = vsel %vm802, %v926, %v925
        %v928 = vperm.slane %v518, %v742
        %v929 = vperm.slane %v520, %v744
        %v930 = vsel %vm746, %v929, %v928
        %v931 = vperm.slane %v522, %v748
        %v932 = vsel %vm750, %v931, %v930
        %v933 = vperm.slane %v524, %v752
        %v934 = vsel %vm754, %v933, %v932
        %v935 = vperm.slane %v526, %v756
        %v936 = vsel %vm758, %v935, %v934
        %v937 = vperm.slane %v528, %v760
        %v938 = vsel %vm762, %v937, %v936
        %v939 = vperm.slane %v530, %v764
        %v940 = vsel %vm766, %v939, %v938
        %v941 = vperm.slane %v532, %v768
        %v942 = vsel %vm770, %v941, %v940
        %v943 = vperm.slane %v534, %v772
        %v944 = vsel %vm774, %v943, %v942
        %v945 = vperm.slane %v536, %v776
        %v946 = vsel %vm778, %v945, %v944
        %v947 = vperm.slane %v538, %v780
        %v948 = vsel %vm782, %v947, %v946
        %v949 = vperm.slane %v540, %v784
        %v950 = vsel %vm786, %v949, %v948
        %v951 = vperm.slane %v542, %v788
        %v952 = vsel %vm790, %v951, %v950
        %v953 = vperm.slane %v544, %v792
        %v954 = vsel %vm794, %v953, %v952
        %v955 = vperm.slane %v546, %v796
        %v956 = vsel %vm798, %v955, %v954
        %v957 = vperm.slane %v548, %v800
        %v958 = vsel %vm802, %v957, %v956
        %v959 = vperm.slane %v550, %v742
        %v960 = vperm.slane %v552, %v744
        %v961 = vsel %vm746, %v960, %v959
        %v962 = vperm.slane %v554, %v748
        %v963 = vsel %vm750, %v962, %v961
        %v964 = vperm.slane %v556, %v752
        %v965 = vsel %vm754, %v964, %v963
        %v966 = vperm.slane %v558, %v756
        %v967 = vsel %vm758, %v966, %v965
        %v968 = vperm.slane %v560, %v760
        %v969 = vsel %vm762, %v968, %v967
        %v970 = vperm.slane %v562, %v764
        %v971 = vsel %vm766, %v970, %v969
        %v972 = vperm.slane %v564, %v768
        %v973 = vsel %vm770, %v972, %v971
        %v974 = vperm.slane %v566, %v772
        %v975 = vsel %vm774, %v974, %v973
        %v976 = vperm.slane %v568, %v776
        %v977 = vsel %vm778, %v976, %v975
        %v978 = vperm.slane %v570, %v780
        %v979 = vsel %vm782, %v978, %v977
        %v980 = vperm.slane %v572, %v784
        %v981 = vsel %vm786, %v980, %v979
        %v982 = vperm.slane %v574, %v788
        %v983 = vsel %vm790, %v982, %v981
        %v984 = vperm.slane %v576, %v792
        %v985 = vsel %vm794, %v984, %v983
        %v986 = vperm.slane %v578, %v796
        %v987 = vsel %vm798, %v986, %v985
        %v988 = vperm.slane %v580, %v800
        %v989 = vsel %vm802, %v988, %v987
        %v990 = vperm.slane %v582, %v742
        %v991 = vperm.slane %v584, %v744
        %v992 = vsel %vm746, %v991, %v990
        %v993 = vperm.slane %v586, %v748
        %v994 = vsel %vm750, %v993, %v992
        %v995 = vperm.slane %v588, %v752
        %v996 = vsel %vm754, %v995, %v994
        %v997 = vperm.slane %v590, %v756
        %v998 = vsel %vm758, %v997, %v996
        %v999 = vperm.slane %v592, %v760
        %v1000 = vsel %vm762, %v999, %v998
        %v1001 = vperm.slane %v594, %v764
        %v1002 = vsel %vm766, %v1001, %v1000
        %v1003 = vperm.slane %v596, %v768
        %v1004 = vsel %vm770, %v1003, %v1002
        %v1005 = vperm.slane %v598, %v772
        %v1006 = vsel %vm774, %v1005, %v1004
        %v1007 = vperm.slane %v600, %v776
        %v1008 = vsel %vm778, %v1007, %v1006
        %v1009 = vperm.slane %v602, %v780
        %v1010 = vsel %vm782, %v1009, %v1008
        %v1011 = vperm.slane %v604, %v784
        %v1012 = vsel %vm786, %v1011, %v1010
        %v1013 = vperm.slane %v606, %v788
        %v1014 = vsel %vm790, %v1013, %v1012
        %v1015 = vperm.slane %v608, %v792
        %v1016 = vsel %vm794, %v1015, %v1014
        %v1017 = vperm.slane %v610, %v796
        %v1018 = vsel %vm798, %v1017, %v1016
        %v1019 = vperm.slane %v612, %v800
        %v1020 = vsel %vm802, %v1019, %v1018
        %vm1021 = vcmask 1041409
        %v1022 = vsel %vm1021, %v834, %v803
        %vm1023 = vcmask 1042434
        %v1024 = vsel %vm1023, %v865, %v1022
        %vm1025 = vcmask 1043459
        %v1026 = vsel %vm1025, %v896, %v1024
        %vm1027 = vcmask 1044484
        %v1028 = vsel %vm1027, %v927, %v1026
        %vm1029 = vcmask 1045509
        %v1030 = vsel %vm1029, %v958, %v1028
        %vm1031 = vcmask 1046534
        %v1032 = vsel %vm1031, %v989, %v1030
        %vm1033 = vcmask 1047559
        %v1034 = vsel %vm1033, %v1020, %v1032
        %v1036 = vadd.f32 %v228, %v1034
        %1037 = vst [vmem:[#allocation2] sm:$0xff] %v1036
        %p1038 = scmp.eq.s32.totalorder %s26, 1
        // Predicated region
        $region45: #{tpu_custom_call.1} parent=31 // pred_check
          %p1039 = pneg %p1038
        $region46: #{tpu_custom_call.1} parent=31 // pred_check_branch
          %1041 = sbr.rel (%p1039) target = $region48
        $region47: #{tpu_custom_call.1} parent=31 // pred_region
          %v1042 = vld [vmem:[#allocation2] sm:$0xff]
          %v1043 = vmul.f32 %v1042, 0.00390625
          %v1044 = vld [vmem:[%s1] sm:$0xff]
          %v1045 = vld [vmem:[%s1 + $0x8] sm:$0xff]
          %v1046 = vld [vmem:[%s1 + $0x10] sm:$0xff]
          %v1047 = vld [vmem:[%s1 + $0x18] sm:$0xff]
          %v1048 = vld [vmem:[%s1 + $0x20] sm:$0xff]
          %v1049 = vld [vmem:[%s1 + $0x28] sm:$0xff]
          %v1050 = vld [vmem:[%s1 + $0x30] sm:$0xff]
          %v1051 = vld [vmem:[%s1 + $0x38] sm:$0xff]
          %v1052 = vld [vmem:[%s1 + $0x40] sm:$0xff]
          %v1053 = vld [vmem:[%s1 + $0x48] sm:$0xff]
          %v1054 = vld [vmem:[%s1 + $0x50] sm:$0xff]
          %v1055 = vld [vmem:[%s1 + $0x58] sm:$0xff]
          %v1056 = vld [vmem:[%s1 + $0x60] sm:$0xff]
          %v1057 = vld [vmem:[%s1 + $0x68] sm:$0xff]
          %v1058 = vld [vmem:[%s1 + $0x70] sm:$0xff]
          %v1059 = vld [vmem:[%s1 + $0x78] sm:$0xff]
          %v1060 = vld [vmem:[#allocation6] sm:$0x1]
          %v1062 = vperm.slane %v1060, 0
          %1064 = vmatpush.msra.mxu0 %v1059
          %1065 = vmatpush.msra.mxu0 %v1058
          %1066 = vmatpush.msra.mxu0 %v1057
          %1067 = vmatpush.msra.mxu0 %v1056
          %1068 = vmatpush.msra.mxu0 %v1055
          %1069 = vmatpush.msra.mxu0 %v1054
          %1070 = vmatpush.msra.mxu0 %v1053
          %1071 = vmatpush.msra.mxu0 %v1052
          %1072 = vmatpush.msra.mxu0 %v1051
          %1073 = vmatpush.msra.mxu0 %v1050
          %1074 = vmatpush.msra.mxu0 %v1049
          %1075 = vmatpush.msra.mxu0 %v1048
          %1076 = vmatpush.msra.mxu0 %v1047
          %1077 = vmatpush.msra.mxu0 %v1046
          %1078 = vmatpush.msra.mxu0 %v1045
          %1079 = vmatpush.msra.mxu0 %v1044
          %1080 = vmatmul.f32.gmra.mxu0 %v1043
          %v1081 = vpop.f32.mrf.mxu0
          %v1082 = vadd.f32 %v1062, %v1081
          %1083 = vdwg.mxu0
          %vm1084 = vcmask 80896
          %1085 = vst.msk [vmem:[%s221] sm:$0xff] %vm1084, %v1082
        $region48: #{tpu_custom_call.1} parent=31 // pred_fallthru
          _
        %s1086 = sand.u32 %s111, 1
        %s1087 = scalar_lea.sflag [#allocation5], %s1086
        %s1088 = sand.u32 %s111, 1
        %s1089 = smul.addr %s1088, 8
        %s1090 = scalar_lea.vmem [#allocation8], %s1089
        // Predicated region
        $region49: #{tpu_custom_call.1} parent=31 // pred_check
          %p1091 = pneg %p121
        $region50: #{tpu_custom_call.1} parent=31 // pred_check_branch
          %1093 = sbr.rel (%p1091) target = $region52
        $region51: #{tpu_custom_call.1} parent=31 // pred_region
          %1095 = vsyncadd %s1087, 0
          %s1096 = smul.addr %s25, 8
          %s1097 = scalar_lea.hbm %s3, %s1096
          %s1099 = sshll.u32 %s1090, 4
          %s1100 = int_to_ptr.vmem [resolvable:$true] %s1099
          %s1101 = sshll.u32 %s1097, 4
          %s1102 = int_to_ptr.hbm [resolvable:$true] %s1101
          %1104 = dma.vmem_to_hbm [thread:$0]  %s1100, 128, %s1102, %s1087
        $region52: #{tpu_custom_call.1} parent=31 // pred_fallthru
          _
      $region32: #{tpu_custom_call.1} parent=5 // pred_fallthru
        _
      %p1105 = scmp.le.s32.totalorder 2, %s16
      // Predicated region
      $region53: #{tpu_custom_call.1} parent=5 // pred_check
        %p1106 = pneg %p1105
      $region54: #{tpu_custom_call.1} parent=5 // pred_check_branch
        %1108 = sbr.rel (%p1106) target = $region56
      $region55: #{tpu_custom_call.1} parent=5 // pred_region
        %s1109 = ssub.s32 %s16, 2
        // Predicated region
        $region57: #{tpu_custom_call.1} parent=55 // pred_check
          %p1110 = pneg %p127
        $region58: #{tpu_custom_call.1} parent=55 // pred_check_branch
          %1112 = sbr.rel (%p1110) target = $region60
        $region59: #{tpu_custom_call.1} parent=55 // pred_region
          %s1113 = sand.u32 %s112, 1
          %s1114 = scalar_lea.sflag [#allocation5], %s1113
          %s1115 = sand.u32 %s112, 1
          %s1116 = smul.addr %s1115, 8
          %s1117 = scalar_lea.vmem [#allocation8], %s1116
          %1119 = dma.done %s1114, 128
        $region60: #{tpu_custom_call.1} parent=55 // pred_fallthru
          _
      $region56: #{tpu_custom_call.1} parent=5 // pred_fallthru
        _
    $region6: #{tpu_custom_call.1} parent=1 // loop_footer
      %s20 = sadd.s32 1, %s16
    $region7: #{tpu_custom_call.1} parent=1 // loop_footer_branch
      %15 = sbr.rel target = $region3
    $region8: #{tpu_custom_call.1} parent=1 // loop_exit
      _
    %1120 = vsyncpa [#allocation4], 1
    %s1121 = scalar_lea.sflag [#allocation4], 1
    %1122 = vsyncpa %s1121, 1
    %1123 = vsyncpa [#allocation7], 1
    %1124 = vsyncpa [#allocation5], 1
    %s1125 = scalar_lea.sflag [#allocation5], 1
    %1126 = vsyncpa %s1125, 1

</llo_original>
